<compile_context>
chip_gen: v7x
topology: tpu7x:2x2x1
jax: 0.10.0
libtpu: 0.0.40
codegen_flags: <defaults>
</compile_context>

<pallas_src>
import functools

import jax
import jax.numpy as jnp
import numpy as np
from jax import lax
from jax.experimental import pallas as pl
from jax.experimental.pallas import tpu as pltpu


def _round_up(n, m):
    return -(-n // m) * m


def upsample1d_kernel(x_ref, halo_ref, w_ref, b_ref, o_ref, *, C, S, TL):
    """One (batch, L-tile) grid step of ConvTranspose1d(C, C, 4, 2, 1).

    x_ref:    (1, TL, C)     input tile, channels-last (compute dtype)
    halo_ref: (1, 1, 2, C)   row 0: x[tile_start-1], row 1: x[tile_end]
                             (zeros at the global sequence boundaries)
    w_ref:    (C, 4*S)       fused taps; columns [k*S : k*S + C] = W_k,
                             S = C rounded up to a 128-lane tile
    b_ref:    (1, C)         bias (f32)
    o_ref:    (1, TL, 2*C)   lane-dense output: [:, :C] even (2j), [:, C:] odd (2j+1)
    """
    x = x_ref[0]                                   # (TL, C)
    w = w_ref[...]                                 # (C, 4S)
    b = b_ref[...]                                 # (1, C), f32

    # Single wide MXU matmul on the UNshifted tile: a[:, k*S:k*S+C] = x @ W_k.
    a = jnp.dot(x, w, preferred_element_type=jnp.float32)        # (TL, 4S)
    a0 = a[:, 0 * S:0 * S + C]     # x[j] @ W0   (slice starts are 128-aligned)
    a1 = a[:, 1 * S:1 * S + C]     # x[j] @ W1
    a2 = a[:, 2 * S:2 * S + C]     # x[j] @ W2
    a3 = a[:, 3 * S:3 * S + C]     # x[j] @ W3

    # Halo partials against only the two taps we actually use (tiny 1-row dots).
    halo = halo_ref[0, 0]                                         # (2, C)
    prev_a3 = jnp.dot(halo[0:1, :], w_ref[:, 3 * S:3 * S + C],
                      preferred_element_type=jnp.float32)         # (1, C) = x[-1] @ W3
    next_a0 = jnp.dot(halo[1:2, :], w_ref[:, 0:C],
                      preferred_element_type=jnp.float32)         # (1, C) = x[TL] @ W0

    # Shift the partial RESULTS (not the input) by one row on the XLU
    # (pltpu.roll uses a different VLIW slot than the VALU adds below),
    # then patch the single wrapped-around boundary row.
    a3_prev = pltpu.roll(a3, shift=1, axis=0)          # a3_prev[j] = a3[j-1]
    a0_next = pltpu.roll(a0, shift=TL - 1, axis=0)     # a0_next[j] = a0[j+1]
    row = lax.broadcasted_iota(jnp.int32, (TL, C), 0)
    a3_prev = jnp.where(row == 0, prev_a3, a3_prev)
    a0_next = jnp.where(row == TL - 1, next_a0, a0_next)

    #   out[2j]   = x[j]@W1 + x[j-1]@W3 + b
    #   out[2j+1] = x[j+1]@W0 + x[j]@W2 + b
    y_even = a1 + a3_prev + b
    y_odd = a2 + a0_next + b

    # Lane-dense stores into the (TL, 2C) output block (dense sublanes; unmasked
    # full-width vst when C is a multiple of 128).
    o_ref[0, :, :C] = y_even.astype(o_ref.dtype)
    o_ref[0, :, C:] = y_odd.astype(o_ref.dtype)


def _pick_tile_l(L, tile_l):
    """Pick a sequence tile: prefer a multiple-of-8 divisor of L (no pad copy,
    keeps the (8,128) block rule); fall back to padding only if none exists."""
    tile_l = max(8, tile_l - tile_l % 8)
    if L <= tile_l:
        return L, False                      # single full tile, no padding
    if L % tile_l == 0:
        return tile_l, False
    for t in range(tile_l, 7, -8):
        if L % t == 0:
            return t, False                  # divisor of L, multiple of 8
    return tile_l, True                      # ragged: zero-pad fallback


def _vmem_budget(TL, C, S, compute_dtype, out_dtype):
    """Generation-aware VMEM budget derived from the actual block sizes."""
    lane = lambda n: _round_up(n, 128)
    sub = lambda n: _round_up(n, 8)
    ib = jnp.dtype(compute_dtype).itemsize
    ob = jnp.dtype(out_dtype).itemsize
    x_buf = sub(TL) * lane(C) * ib * 2              # double-buffered input tile
    halo_buf = sub(2) * lane(C) * ib * 2
    w_buf = sub(C) * lane(4 * S) * ib               # single-buffered (Buffered(1))
    b_buf = 8 * lane(C) * 4
    o_buf = sub(TL) * lane(2 * C) * ob * 2          # double-buffered output tile
    tmp = sub(TL) * lane(4 * S) * 4 * 3             # f32 partials + shifted copies
    need = x_buf + halo_buf + w_buf + b_buf + o_buf + tmp
    try:
        cap = int(pltpu.get_tpu_info().vmem_capacity_bytes * 3 // 4)   # 96 MiB v5e/v6e, 48 MiB v7x
    except Exception:
        cap = 48 * 1024 * 1024                      # safe on all generations
    budget = min(max(int(need * 1.5) + (2 << 20), 16 << 20), cap)
    return max(budget, int(need * 1.25) + (1 << 20))


def upsample1d_nlc(x_nlc, weight, bias, *, tile_l=512, compute_dtype=jnp.bfloat16):
    """Channels-last ConvTranspose1d(dim, dim, 4, 2, 1): (N, L, C) -> (N, 2L, C).

    compute_dtype: dtype x/weights are streamed to the MXU in.  bfloat16 (default)
    halves HBM + VMEM traffic on this bandwidth-bound op; accumulation stays f32
    and the output keeps x's dtype.  Pass jnp.float32 for bit-tight accuracy.
    """
    N, L, C = x_nlc.shape
    out_dtype = x_nlc.dtype

    TL, need_pad = _pick_tile_l(L, tile_l)
    if need_pad:
        # TODO(synk): handle the ragged tail tile in-kernel instead of a pad copy.
        L_eff = _round_up(L, TL)
        x_nlc = jnp.pad(x_nlc, ((0, 0), (0, L_eff - L), (0, 0)))
    else:
        L_eff = L
    num_lt = L_eff // TL

    # Tiny per-tile halo rows: prev[t] = x[t*TL - 1], next[t] = x[(t+1)*TL],
    # zeros at the global boundaries (preserves ConvTranspose zero padding).
    first_rows = x_nlc[:, ::TL, :]                        # (N, num_lt, C)
    last_rows = x_nlc[:, TL - 1::TL, :]                   # (N, num_lt, C)
    zrow = jnp.zeros((N, 1, C), x_nlc.dtype)
    prev_halo = jnp.concatenate([zrow, last_rows[:, :-1, :]], axis=1)
    next_halo = jnp.concatenate([first_rows[:, 1:, :], zrow], axis=1)
    halo = jnp.stack([prev_halo, next_halo], axis=2)      # (N, num_lt, 2, C)

    # Fuse the four (C, C) taps into one (C, 4*S) RHS; S = C rounded up to 128
    # lanes so each tap's output slice starts on a lane-tile boundary.
    S = _round_up(C, 128)
    w_taps = jnp.transpose(weight, (0, 2, 1))             # (C_in, 4, C_out): [:, k, :] = W_k
    if S != C:
        w_taps = jnp.pad(w_taps, ((0, 0), (0, 0), (0, S - C)))
    w_fused = w_taps.reshape(C, 4 * S)
    b_1c = bias.reshape(1, C).astype(jnp.float32)

    # bf16 streaming (f32 MXU accumulation kept in-kernel).
    x_nlc = x_nlc.astype(compute_dtype)
    halo = halo.astype(compute_dtype)
    w_fused = w_fused.astype(compute_dtype)

    vmem_limit = _vmem_budget(TL, C, S, compute_dtype, out_dtype)
    kernel = functools.partial(upsample1d_kernel, C=C, S=S, TL=TL)

    out = pl.pallas_call(
        kernel,
        out_shape=jax.ShapeDtypeStruct((N, L_eff, 2 * C), out_dtype),
        grid_spec=pltpu.PrefetchScalarGridSpec(
            num_scalar_prefetch=0,
            grid=(N, num_lt),
            in_specs=[
                pl.BlockSpec((1, TL, C), lambda n, l: (n, l, 0)),
                pl.BlockSpec((1, 1, 2, C), lambda n, l: (n, l, 0, 0)),
                # grid-invariant weight/bias: single-buffered, no 2x VMEM copy
                pl.BlockSpec((C, 4 * S), lambda n, l: (0, 0),
                             pipeline_mode=pl.Buffered(1)),
                pl.BlockSpec((1, C), lambda n, l: (0, 0),
                             pipeline_mode=pl.Buffered(1)),
            ],
            out_specs=pl.BlockSpec((1, TL, 2 * C), lambda n, l: (n, l, 0)),
        ),
        compiler_params=pltpu.CompilerParams(
            # both grid axes are independent -> shard across TCs (v7x megacore)
            dimension_semantics=("parallel", "parallel"),
            vmem_limit_bytes=vmem_limit,
        ),
    )(x_nlc, halo, w_fused, b_1c)

    # (N, L_eff, 2C) -> (N, 2*L_eff, C): free, byte-identical contiguous reshape
    # (even outputs land at 2j, odd at 2j+1); no in-kernel interleave needed.
    out = out.reshape(N, 2 * L_eff, C)
    if L_eff != L:
        out = out[:, :2 * L, :]
    return out


def upsample1d(x_ncl, weight, bias, *, tile_l=512, compute_dtype=jnp.bfloat16):
    """PyTorch-layout Upsample1d.forward: x (N, C, L) -> (N, C, 2L).

    The NCL<->NLC transposes are boundary glue only (a full HBM pass each —
    significant on v5e); a channels-last model should call upsample1d_nlc
    directly so they disappear.
    """
    x_nlc = jnp.transpose(x_ncl, (0, 2, 1))
    out_nlc = upsample1d_nlc(x_nlc, weight, bias, tile_l=tile_l,
                             compute_dtype=compute_dtype)
    return jnp.transpose(out_nlc, (0, 2, 1))


def reference_conv_transpose1d(x_ncl, weight, bias):
    """Pure-JAX reference: ConvTranspose1d(k=4, s=2, p=1) via dilated conv."""
    # conv_transpose(x, W, s, p) == conv(dilate(x, s), flip_k(W)^T, pad=k-1-p)
    w_oik = jnp.flip(jnp.transpose(weight, (1, 0, 2)), axis=2)  # (C_out, C_in, k)
    y = lax.conv_general_dilated(
        x_ncl, w_oik,
        window_strides=(1,),
        padding=[(2, 2)],            # k - 1 - p = 4 - 1 - 1 = 2
        lhs_dilation=(2,),
        dimension_numbers=("NCH", "OIH", "NCH"),
    )
    return y + bias.reshape(1, -1, 1)


if __name__ == "__main__":
    key = jax.random.PRNGKey(0)

    # Case 1: module-sized small shapes (single L tile), f32 streaming -> tight tol.
    N, C, L = 2, 8, 16
    kx, kw, kb, key = jax.random.split(key, 4)
    x = jax.random.normal(kx, (N, C, L), dtype=jnp.float32)
    # nn.ConvTranspose1d(dim, dim, 4) weight shape: (C_in, C_out, 4)
    weight = jax.random.normal(kw, (C, C, 4), dtype=jnp.float32) * 0.1
    bias = jax.random.normal(kb, (C,), dtype=jnp.float32) * 0.1

    out = jax.block_until_ready(upsample1d(x, weight, bias, compute_dtype=jnp.float32))
    ref = jax.block_until_ready(reference_conv_transpose1d(x, weight, bias))
    assert out.shape == (N, C, 2 * L), out.shape
    np.testing.assert_allclose(np.asarray(out), np.asarray(ref),
                               rtol=1e-4, atol=1e-4)

    # Case 2: multi-tile grid over L (cross-tile halos, divisor tiling -> no pad
    # copy), f32 streaming, tight tol.
    N2, C2, L2 = 2, 16, 40
    kx2, kw2, kb2, key = jax.random.split(key, 4)
    x2 = jax.random.normal(kx2, (N2, C2, L2), dtype=jnp.float32)
    w2 = jax.random.normal(kw2, (C2, C2, 4), dtype=jnp.float32) * 0.1
    b2 = jax.random.normal(kb2, (C2,), dtype=jnp.float32) * 0.1

    out2 = jax.block_until_ready(upsample1d(x2, w2, b2, tile_l=16,
                                            compute_dtype=jnp.float32))
    ref2 = jax.block_until_ready(reference_conv_transpose1d(x2, w2, b2))
    assert out2.shape == (N2, C2, 2 * L2), out2.shape
    np.testing.assert_allclose(np.asarray(out2), np.asarray(ref2),
                               rtol=1e-4, atol=1e-4)

    # Case 3: default bf16 streaming path (f32 accumulation) -> looser tolerance.
    out3 = jax.block_until_ready(upsample1d(x2, w2, b2, tile_l=16))
    assert out3.shape == (N2, C2, 2 * L2), out3.shape
    np.testing.assert_allclose(np.asarray(out3), np.asarray(ref2),
                               rtol=3e-2, atol=3e-2)

    print("KERNEL_OK")
</pallas_src>

<mosaic_0001>
module attributes {stable_mosaic.version = 11 : i64} {
  func.func @upsample1d_kernel(%arg0: i32, %arg1: i32, %arg2: memref<1x16x8xf32, #tpu.memory_space<vmem>>, %arg3: memref<1x1x2x8xf32, #tpu.memory_space<vmem>>, %arg4: memref<8x512xf32, #tpu.memory_space<vmem>>, %arg5: memref<1x8xf32, #tpu.memory_space<vmem>>, %arg6: memref<1x16x16xf32, #tpu.memory_space<vmem>>) attributes {dimension_semantics = [#tpu.dimension_semantics<parallel>, #tpu.dimension_semantics<parallel>], iteration_bounds = array<i64: 2, 1>, scalar_prefetch = 0 : i64, scratch_operands = 0 : i64, tpu.core_type = #tpu.core_type<tc>, window_params = [{transform_indices = @transform_0, window_bounds = array<i64: 1, 16, 8>}, {transform_indices = @transform_1, window_bounds = array<i64: 1, 1, 2, 8>}, {pipeline_mode = #tpu.pipeline_mode<synchronous>, transform_indices = @transform_2, window_bounds = array<i64: 8, 512>}, {pipeline_mode = #tpu.pipeline_mode<synchronous>, transform_indices = @transform_3, window_bounds = array<i64: 1, 8>}, {transform_indices = @transform_4, window_bounds = array<i64: 1, 16, 16>}]} {
    %c0 = arith.constant 0 : index
    %c0_0 = arith.constant 0 : index
    %c0_1 = arith.constant 0 : index
    %0 = vector.load %arg2[%c0, %c0_0, %c0_1] : memref<1x16x8xf32, #tpu.memory_space<vmem>>, vector<1x16x8xf32>
    %1 = vector.shape_cast %0 : vector<1x16x8xf32> to vector<16x8xf32>
    %c0_2 = arith.constant 0 : index
    %c0_3 = arith.constant 0 : index
    %2 = vector.load %arg4[%c0_2, %c0_3] : memref<8x512xf32, #tpu.memory_space<vmem>>, vector<8x512xf32>
    %c0_4 = arith.constant 0 : index
    %c0_5 = arith.constant 0 : index
    %3 = vector.load %arg5[%c0_4, %c0_5] : memref<1x8xf32, #tpu.memory_space<vmem>>, vector<1x8xf32>
    %cst = arith.constant dense<0.000000e+00> : vector<16x512xf32>
    %4 = tpu.matmul %1, %2, %cst {dimension_numbers = #tpu.dot_dimension_numbers<[1], [0], [0], [1], [0, 0, 1, 1], [], []>} : vector<16x8xf32>, vector<8x512xf32>, vector<16x512xf32> -> vector<16x512xf32>
    %5 = vector.extract_strided_slice %4 {offsets = [0, 0], sizes = [16, 8], strides = [1, 1]} : vector<16x512xf32> to vector<16x8xf32>
    %6 = vector.extract_strided_slice %4 {offsets = [0, 128], sizes = [16, 8], strides = [1, 1]} : vector<16x512xf32> to vector<16x8xf32>
    %7 = vector.extract_strided_slice %4 {offsets = [0, 256], sizes = [16, 8], strides = [1, 1]} : vector<16x512xf32> to vector<16x8xf32>
    %8 = vector.extract_strided_slice %4 {offsets = [0, 384], sizes = [16, 8], strides = [1, 1]} : vector<16x512xf32> to vector<16x8xf32>
    %c0_6 = arith.constant 0 : index
    %c0_7 = arith.constant 0 : index
    %c0_8 = arith.constant 0 : index
    %c0_9 = arith.constant 0 : index
    %9 = vector.load %arg3[%c0_6, %c0_7, %c0_8, %c0_9] : memref<1x1x2x8xf32, #tpu.memory_space<vmem>>, vector<1x1x2x8xf32>
    %10 = vector.shape_cast %9 : vector<1x1x2x8xf32> to vector<2x8xf32>
    %11 = vector.extract_strided_slice %10 {offsets = [0, 0], sizes = [1, 8], strides = [1, 1]} : vector<2x8xf32> to vector<1x8xf32>
    %c0_10 = arith.constant 0 : index
    %c384 = arith.constant 384 : index
    %12 = vector.load %arg4[%c0_10, %c384] : memref<8x512xf32, #tpu.memory_space<vmem>>, vector<8x8xf32>
    %cst_11 = arith.constant dense<0.000000e+00> : vector<1x8xf32>
    %13 = tpu.matmul %11, %12, %cst_11 {dimension_numbers = #tpu.dot_dimension_numbers<[1], [0], [0], [1], [0, 0, 1, 1], [], []>} : vector<1x8xf32>, vector<8x8xf32>, vector<1x8xf32> -> vector<1x8xf32>
    %14 = vector.extract_strided_slice %10 {offsets = [1, 0], sizes = [1, 8], strides = [1, 1]} : vector<2x8xf32> to vector<1x8xf32>
    %c0_12 = arith.constant 0 : index
    %c0_13 = arith.constant 0 : index
    %15 = vector.load %arg4[%c0_12, %c0_13] : memref<8x512xf32, #tpu.memory_space<vmem>>, vector<8x8xf32>
    %cst_14 = arith.constant dense<0.000000e+00> : vector<1x8xf32>
    %16 = tpu.matmul %14, %15, %cst_14 {dimension_numbers = #tpu.dot_dimension_numbers<[1], [0], [0], [1], [0, 0, 1, 1], [], []>} : vector<1x8xf32>, vector<8x8xf32>, vector<1x8xf32> -> vector<1x8xf32>
    %c1_i32 = arith.constant 1 : i32
    %17 = tpu.dynamic_rotate %8 by %c1_i32 dim 0 : vector<16x8xf32>, i32 -> vector<16x8xf32>
    %c15_i32 = arith.constant 15 : i32
    %18 = tpu.dynamic_rotate %5 by %c15_i32 dim 0 : vector<16x8xf32>, i32 -> vector<16x8xf32>
    %19 = tpu.iota {dimensions = array<i32: 0>} : vector<16x8xi32>
    %c0_i32 = arith.constant 0 : i32
    %20 = vector.broadcast %c0_i32 : i32 to vector<16x8xi32>
    %21 = arith.cmpi eq, %19, %20 : vector<16x8xi32>
    %22 = vector.shape_cast %13 : vector<1x8xf32> to vector<1x8xf32>
    %23 = vector.broadcast %22 : vector<1x8xf32> to vector<16x8xf32>
    %24 = arith.select %21, %23, %17 : vector<16x8xi1>, vector<16x8xf32>
    %c15_i32_15 = arith.constant 15 : i32
    %25 = vector.broadcast %c15_i32_15 : i32 to vector<16x8xi32>
    %26 = arith.cmpi eq, %19, %25 : vector<16x8xi32>
    %27 = vector.shape_cast %16 : vector<1x8xf32> to vector<1x8xf32>
    %28 = vector.broadcast %27 : vector<1x8xf32> to vector<16x8xf32>
    %29 = arith.select %26, %28, %18 : vector<16x8xi1>, vector<16x8xf32>
    %30 = arith.addf %6, %24 : vector<16x8xf32>
    %31 = vector.broadcast %3 : vector<1x8xf32> to vector<16x8xf32>
    %32 = arith.addf %30, %31 : vector<16x8xf32>
    %33 = arith.addf %7, %29 : vector<16x8xf32>
    %34 = vector.broadcast %3 : vector<1x8xf32> to vector<16x8xf32>
    %35 = arith.addf %33, %34 : vector<16x8xf32>
    %c0_16 = arith.constant 0 : index
    %c0_17 = arith.constant 0 : index
    %c0_18 = arith.constant 0 : index
    %36 = vector.load %arg6[%c0_16, %c0_17, %c0_18] : memref<1x16x16xf32, #tpu.memory_space<vmem>>, vector<1x16x8xf32>
    %37 = vector.shape_cast %36 : vector<1x16x8xf32> to vector<16x8xf32>
    %38 = vector.shape_cast %32 : vector<16x8xf32> to vector<1x16x8xf32>
    tpu.vector_store %arg6[%c0_16, %c0_17, %c0_18], %38 {strides = array<i32>} : memref<1x16x16xf32, #tpu.memory_space<vmem>>, vector<1x16x8xf32>,
    %c0_19 = arith.constant 0 : index
    %c0_20 = arith.constant 0 : index
    %c8 = arith.constant 8 : index
    %39 = vector.load %arg6[%c0_19, %c0_20, %c8] : memref<1x16x16xf32, #tpu.memory_space<vmem>>, vector<1x16x8xf32>
    %40 = vector.shape_cast %39 : vector<1x16x8xf32> to vector<16x8xf32>
    %41 = vector.shape_cast %35 : vector<16x8xf32> to vector<1x16x8xf32>
    tpu.vector_store %arg6[%c0_19, %c0_20, %c8], %41 {strides = array<i32>} : memref<1x16x16xf32, #tpu.memory_space<vmem>>, vector<1x16x8xf32>,
    return
  }
  func.func @transform_0(%arg0: i32, %arg1: i32) -> (i32, i32, i32) {
    %c0_i32 = arith.constant 0 : i32
    %c0_i32_0 = arith.constant 0 : i32
    return %arg0, %arg1, %c0_i32 : i32, i32, i32
  }
  func.func @transform_1(%arg0: i32, %arg1: i32) -> (i32, i32, i32, i32) {
    %c0_i32 = arith.constant 0 : i32
    %c0_i32_0 = arith.constant 0 : i32
    %c0_i32_1 = arith.constant 0 : i32
    return %arg0, %arg1, %c0_i32, %c0_i32_0 : i32, i32, i32, i32
  }
  func.func @transform_2(%arg0: i32, %arg1: i32) -> (i32, i32) {
    %c0_i32 = arith.constant 0 : i32
    %c0_i32_0 = arith.constant 0 : i32
    %c0_i32_1 = arith.constant 0 : i32
    return %c0_i32, %c0_i32_0 : i32, i32
  }
  func.func @transform_3(%arg0: i32, %arg1: i32) -> (i32, i32) {
    %c0_i32 = arith.constant 0 : i32
    %c0_i32_0 = arith.constant 0 : i32
    %c0_i32_1 = arith.constant 0 : i32
    return %c0_i32, %c0_i32_0 : i32, i32
  }
  func.func @transform_4(%arg0: i32, %arg1: i32) -> (i32, i32, i32) {
    %c0_i32 = arith.constant 0 : i32
    %c0_i32_0 = arith.constant 0 : i32
    return %arg0, %arg1, %c0_i32 : i32, i32, i32
  }
}

</mosaic_0001>

<llo_original>
// kernel: tpu_custom_call.1
$region0: #{tpu_custom_call.1}
  #allocation0 [shape = 'u32[]', space=smem, size = 0x4, offset = 0x4, fixed_abs, tag = 'smem constant byte address 0x4 - core index']
  #allocation1 [shape = 'u32[144,128]{1,0:T(1,128)}', space=vmem, size = 0x12000, scoped, tag = 'internal scratch']
  %s0 = inlined_call_operand.vmem [shape: f32[2,16,8], index: 0, kind: input, shape index: {}]
  %s1 = inlined_call_operand.vmem [shape: f32[2,1,2,8], index: 1, kind: input, shape index: {}]
  %s2 = inlined_call_operand.vmem [shape: f32[8,512], index: 2, kind: input, shape index: {}]
  %s3 = inlined_call_operand.vmem [shape: f32[1,8], index: 3, kind: input, shape index: {}]
  %s4 = inlined_call_operand.hbm [shape: f32[2,16,16], index: 4, kind: output, shape index: {}]
  %s5 = sld [smem:[#allocation0]]
  $region49: #{tpu_custom_call.1} parent=0
    _
  %s7 = ssub.s32 1, %s5
  %s8 = scalar_select 0, %s7, %s5
  $region1: #{tpu_custom_call.1} parent=0
    #allocation2 [shape = 'u8[16384]{0}', space=vmem, size = 0x4000, scoped, tag = 'output window, operand 0']
    #allocation3 [shape = 's32[2]{0}', space=sflag, size = 0x8, scoped, tag = 'scoped memory for tpu_custom_call.1']
    %9 = vsyncpa [#allocation3], 0
    %s10 = scalar_lea.sflag [#allocation3], 1
    %11 = vsyncpa %s10, 0
    loop: start=0, step=1, limit=4
    $region2: #{tpu_custom_call.1} parent=1 // loop_pre_header
      _
    $region3: #{tpu_custom_call.1} parent=1 // loop_header
      %s13 = sphi 0, %s17
      %p14 = scmp.ge.s32.totalorder %s13, 4
      %s20 = sphi 0, %s32
      %s21 = sphi 0, %s28
      %s22 = sphi 0, %s20
      %s23 = sphi 0, %s21
      %s24 = sphi 0, %s22
      %s25 = sphi 0, %s23
      %s37 = sphi 0, %s39
      %s40 = sphi 0, %s37
      %s41 = sphi 0, %s40
      %s57 = sphi 0, %s41
      %s65 = sphi 0, %s67
      %s68 = sphi 0, %s65
      %s69 = sphi 0, %s68
      %s85 = sphi 0, %s69
      %s89 = sphi 0, %s89
      %s91 = sphi 0, %s89
      %s92 = sphi 0, %s91
      %s106 = sphi 0, %s92
      %s110 = sphi 0, %s110
      %s112 = sphi 0, %s110
      %s113 = sphi 0, %s112
      %s127 = sphi 0, %s113
      %s135 = sphi 0, %s137
      %s138 = sphi 0, %s135
      %s139 = sphi 0, %s138
      %s155 = sphi 0, %s139
    $region4: #{tpu_custom_call.1} parent=1 // loop_header_branch
      %16 = sbr.rel (%p14) target = $region8
    $region5: #{tpu_custom_call.1} parent=1 // loop_body
      %s18 = ssub.s32 %s13, 1
      %s19 = ssub.s32 %s13, 2
      %s26 = sadd.s32 1, %s21
      %p27 = scmp.ge.s32.totalorder %s26, 1
      %s28 = scalar_select %p27, 0, %s26
      %s29 = sadd.s32 1, %s20
      %s30 = scalar_select %p27, %s29, %s20
      %p31 = scmp.ge.s32.totalorder %s30, 2
      %s32 = scalar_select %p31, 0, %s30
      %s33 = ssub.s32 %s20, %s32
      %s34 = ssub.s32 %s21, %s28
      %s35 = sor.u32 %s33, %s34
      %p36 = scmp.eq.s32.totalorder %s35, 0
      %s38 = sadd.s32 %s37, 1
      %s39 = scalar_select %p36, %s37, %s38
      %p42 = pneg %p36
      %p43 = scmp.eq.s32.totalorder %s13, 1
      %p44 = por %p42, %p43
      %p45 = scmp.ne.s32.totalorder %s37, %s40
      %p46 = scmp.eq.s32.totalorder %s13, 0
      %p47 = por %p45, %p46
      %p48 = scmp.ne.s32.totalorder %s37, %s40
      %p49 = scmp.eq.s32.totalorder %s18, 1
      %p50 = por %p48, %p49
      %p51 = scmp.ne.s32.totalorder %s40, %s41
      %p52 = scmp.eq.s32.totalorder %s18, 0
      %p53 = por %p51, %p52
      %p54 = scmp.ne.s32.totalorder %s40, %s41
      %p55 = scmp.eq.s32.totalorder %s19, 1
      %p56 = por %p54, %p55
      %p58 = scmp.ne.s32.totalorder %s41, %s57
      %p59 = scmp.eq.s32.totalorder %s19, 0
      %p60 = por %p58, %p59
      %s61 = ssub.s32 %s20, %s32
      %s62 = ssub.s32 %s21, %s28
      %s63 = sor.u32 %s61, %s62
      %p64 = scmp.eq.s32.totalorder %s63, 0
      %s66 = sadd.s32 %s65, 1
      %s67 = scalar_select %p64, %s65, %s66
      %p70 = pneg %p64
      %p71 = scmp.eq.s32.totalorder %s13, 1
      %p72 = por %p70, %p71
      %p73 = scmp.ne.s32.totalorder %s65, %s68
      %p74 = scmp.eq.s32.totalorder %s13, 0
      %p75 = por %p73, %p74
      %p76 = scmp.ne.s32.totalorder %s65, %s68
      %p77 = scmp.eq.s32.totalorder %s18, 1
      %p78 = por %p76, %p77
      %p79 = scmp.ne.s32.totalorder %s68, %s69
      %p80 = scmp.eq.s32.totalorder %s18, 0
      %p81 = por %p79, %p80
      %p82 = scmp.ne.s32.totalorder %s68, %s69
      %p83 = scmp.eq.s32.totalorder %s19, 1
      %p84 = por %p82, %p83
      %p86 = scmp.ne.s32.totalorder %s69, %s85
      %p87 = scmp.eq.s32.totalorder %s19, 0
      %p88 = por %p86, %p87
      %s90 = sadd.s32 %s89, 1
      %p93 = scmp.eq.s32.totalorder %s13, 1
      %p94 = scmp.ne.s32.totalorder %s89, %s91
      %p95 = scmp.eq.s32.totalorder %s13, 0
      %p96 = por %p94, %p95
      %p97 = scmp.ne.s32.totalorder %s89, %s91
      %p98 = scmp.eq.s32.totalorder %s18, 1
      %p99 = por %p97, %p98
      %p100 = scmp.ne.s32.totalorder %s91, %s92
      %p101 = scmp.eq.s32.totalorder %s18, 0
      %p102 = por %p100, %p101
      %p103 = scmp.ne.s32.totalorder %s91, %s92
      %p104 = scmp.eq.s32.totalorder %s19, 1
      %p105 = por %p103, %p104
      %p107 = scmp.ne.s32.totalorder %s92, %s106
      %p108 = scmp.eq.s32.totalorder %s19, 0
      %p109 = por %p107, %p108
      %s111 = sadd.s32 %s110, 1
      %p114 = scmp.eq.s32.totalorder %s13, 1
      %p115 = scmp.ne.s32.totalorder %s110, %s112
      %p116 = scmp.eq.s32.totalorder %s13, 0
      %p117 = por %p115, %p116
      %p118 = scmp.ne.s32.totalorder %s110, %s112
      %p119 = scmp.eq.s32.totalorder %s18, 1
      %p120 = por %p118, %p119
      %p121 = scmp.ne.s32.totalorder %s112, %s113
      %p122 = scmp.eq.s32.totalorder %s18, 0
      %p123 = por %p121, %p122
      %p124 = scmp.ne.s32.totalorder %s112, %s113
      %p125 = scmp.eq.s32.totalorder %s19, 1
      %p126 = por %p124, %p125
      %p128 = scmp.ne.s32.totalorder %s113, %s127
      %p129 = scmp.eq.s32.totalorder %s19, 0
      %p130 = por %p128, %p129
      %s131 = ssub.s32 %s20, %s32
      %s132 = ssub.s32 %s21, %s28
      %s133 = sor.u32 %s131, %s132
      %p134 = scmp.eq.s32.totalorder %s133, 0
      %s136 = sadd.s32 %s135, 1
      %s137 = scalar_select %p134, %s135, %s136
      %p140 = pneg %p134
      %p141 = scmp.eq.s32.totalorder %s13, 1
      %p142 = por %p140, %p141
      %p143 = scmp.ne.s32.totalorder %s135, %s138
      %p144 = scmp.eq.s32.totalorder %s13, 0
      %p145 = por %p143, %p144
      %p146 = scmp.ne.s32.totalorder %s135, %s138
      %p147 = scmp.eq.s32.totalorder %s18, 1
      %p148 = por %p146, %p147
      %p149 = scmp.ne.s32.totalorder %s138, %s139
      %p150 = scmp.eq.s32.totalorder %s18, 0
      %p151 = por %p149, %p150
      %p152 = scmp.ne.s32.totalorder %s138, %s139
      %p153 = scmp.eq.s32.totalorder %s19, 1
      %p154 = por %p152, %p153
      %p156 = scmp.ne.s32.totalorder %s139, %s155
      %p157 = scmp.eq.s32.totalorder %s19, 0
      %p158 = por %p156, %p157
      %p159 = scmp.le.s32.totalorder 1, %s13
      %p160 = scmp.lt.s32.totalorder %s13, 3
      %p161 = pnand %p159, %p160
      %p162 = pneg %p161
      // Predicated region
      $region9: #{tpu_custom_call.1} parent=5 // pred_check
        _
      $region10: #{tpu_custom_call.1} parent=5 // pred_check_branch
        %164 = sbr.rel (%p161) target = $region12
      $region11: #{tpu_custom_call.1} parent=5 // pred_region
        %s165 = ssub.s32 %s13, 1
        // Predicated region
        $region13: #{tpu_custom_call.1} parent=11 // pred_check
          %p166 = pneg %p102
        $region14: #{tpu_custom_call.1} parent=11 // pred_check_branch
          %168 = sbr.rel (%p166) target = $region16
        $region15: #{tpu_custom_call.1} parent=11 // pred_region
          _
        $region16: #{tpu_custom_call.1} parent=11 // pred_fallthru
          _
        // Predicated region
        $region17: #{tpu_custom_call.1} parent=11 // pred_check
          %p169 = pneg %p123
        $region18: #{tpu_custom_call.1} parent=11 // pred_check_branch
          %171 = sbr.rel (%p169) target = $region20
        $region19: #{tpu_custom_call.1} parent=11 // pred_region
          _
        $region20: #{tpu_custom_call.1} parent=11 // pred_fallthru
          _
      $region12: #{tpu_custom_call.1} parent=5 // pred_fallthru
        _
      %p172 = scmp.lt.s32.totalorder %s13, 2
      // Predicated region
      $region21: #{tpu_custom_call.1} parent=5 // pred_check
        %p173 = pneg %p172
      $region22: #{tpu_custom_call.1} parent=5 // pred_check_branch
        %175 = sbr.rel (%p173) target = $region24
      $region23: #{tpu_custom_call.1} parent=5 // pred_region
        // Predicated region
        $region25: #{tpu_custom_call.1} parent=23 // pred_check
          %p176 = pneg %p47
        $region26: #{tpu_custom_call.1} parent=23 // pred_check_branch
          %178 = sbr.rel (%p176) target = $region28
        $region27: #{tpu_custom_call.1} parent=23 // pred_region
          %s179 = smul.u32 2, %s21
          %p180 = scmp.lt.s32.totalorder %s20, 1
          %s181 = scalar_select %p180, %s20, 1
          %p182 = scmp.lt.s32.totalorder %s179, 1
          %s183 = scalar_select %p182, %s179, 1
          %s184 = smul.addr %s181, 2
          %s185 = sadd.s32 %s183, %s184
          %s186 = smul.addr %s185, 8
          %s187 = scalar_lea.vmem %s0, %s186
          %s188 = smul.u32 2, %s21
        $region28: #{tpu_custom_call.1} parent=23 // pred_fallthru
          _
        // Predicated region
        $region29: #{tpu_custom_call.1} parent=23 // pred_check
          %p189 = pneg %p75
        $region30: #{tpu_custom_call.1} parent=23 // pred_check_branch
          %191 = sbr.rel (%p189) target = $region32
        $region31: #{tpu_custom_call.1} parent=23 // pred_region
          %p192 = scmp.lt.s32.totalorder %s20, 1
          %s193 = scalar_select %p192, %s20, 1
          %p194 = scmp.lt.s32.totalorder %s21, 0
          %s195 = scalar_select %p194, %s21, 0
          %s196 = sadd.s32 %s195, %s193
          %s197 = smul.addr %s196, 2
          %s198 = scalar_lea.vmem %s1, %s197
        $region32: #{tpu_custom_call.1} parent=23 // pred_fallthru
          _
      $region24: #{tpu_custom_call.1} parent=5 // pred_fallthru
        _
      %p199 = scmp.le.s32.totalorder 1, %s13
      %p200 = scmp.lt.s32.totalorder %s13, 3
      %p201 = pnand %p199, %p200
      %p202 = pneg %p201
      // Predicated region
      $region33: #{tpu_custom_call.1} parent=5 // pred_check
        _
      $region34: #{tpu_custom_call.1} parent=5 // pred_check_branch
        %204 = sbr.rel (%p201) target = $region36
      $region35: #{tpu_custom_call.1} parent=5 // pred_region
        %s205 = ssub.s32 %s13, 1
        %s206 = smul.u32 2, %s23
        %p207 = scmp.lt.s32.totalorder %s22, 1
        %s208 = scalar_select %p207, %s22, 1
        %p209 = scmp.lt.s32.totalorder %s206, 1
        %s210 = scalar_select %p209, %s206, 1
        %s211 = smul.addr %s208, 2
        %s212 = sadd.s32 %s210, %s211
        %s213 = smul.addr %s212, 8
        %s214 = scalar_lea.vmem %s0, %s213
        %p215 = pneg %p53
        %p216 = pneg %p50
        %p217 = scmp.lt.s32.totalorder %s22, 1
        %s218 = scalar_select %p217, %s22, 1
        %p219 = scmp.lt.s32.totalorder %s23, 0
        %s220 = scalar_select %p219, %s23, 0
        %s221 = sadd.s32 %s220, %s218
        %s222 = smul.addr %s221, 2
        %s223 = scalar_lea.vmem %s1, %s222
        %p224 = pneg %p81
        %p225 = pneg %p78
        %p226 = pneg %p102
        %p227 = pneg %p99
        %p228 = pneg %p123
        %p229 = pneg %p120
        %p230 = pneg %p151
        %p231 = pneg %p148
        %s232 = sand.u32 %s138, 1
        %s233 = scalar_lea.sflag [#allocation3], %s232
        %s234 = sand.u32 %s138, 1
        %s235 = smul.addr %s234, 16
        %s236 = scalar_lea.vmem [#allocation2], %s235
        %s237 = smul.u32 2, %s23
        %p238 = scmp.lt.s32.totalorder %s22, 1
        %s239 = scalar_select %p238, %s22, 1
        %p240 = scmp.lt.s32.totalorder %s237, 1
        %s241 = scalar_select %p240, %s237, 1
        %s242 = smul.addr %s239, 2
        %s243 = sadd.s32 %s241, %s242
        %s244 = smul.addr %s243, 8
        %s245 = scalar_lea.vmem %s0, %s244
        %s246 = smul.u32 2, %s23
        %p247 = scmp.lt.s32.totalorder %s22, 1
        %s248 = scalar_select %p247, %s22, 1
        %p249 = scmp.lt.s32.totalorder %s23, 0
        %s250 = scalar_select %p249, %s23, 0
        %s251 = sadd.s32 %s250, %s248
        %s252 = smul.addr %s251, 2
        %s253 = scalar_lea.vmem %s1, %s252
        %s254 = smul.u32 2, %s23
        %v255 = vld [vmem:[%s245] sm:$0xff]
        %v256 = vld [vmem:[%s245 + $0x8] sm:$0xff]
        %v257 = vld [vmem:[%s2] sm:$0xff]
        %v258 = vld [vmem:[%s2 + $0x8] sm:$0xff]
        %v259 = vld [vmem:[%s2 + $0x10] sm:$0xff]
        %v260 = vld [vmem:[%s2 + $0x18] sm:$0xff]
        %v261 = vld [vmem:[%s3] sm:$0x1]
        %vm262 = vcmask 64512
        %v264 = vsel %vm262, %v255, 0
        %v267 = vsel %vm262, %v256, 0
        %269 = vmatprep.subr.mxu0 %v258
        %270 = vmatpush1.msra.mxu0 %v257
        %271 = vmatprep.subr.mxu0 0.0
        %272 = vmatpush1.msra.mxu0 0.0
        %273 = vmatprep.subr.mxu0 0.0
        %274 = vmatpush1.msra.mxu0 0.0
        %275 = vmatprep.subr.mxu0 0.0
        %276 = vmatpush1.msra.mxu0 0.0
        %277 = vmatprep.subr.mxu0 0.0
        %278 = vmatpush1.msra.mxu0 0.0
        %279 = vmatprep.subr.mxu0 0.0
        %280 = vmatpush1.msra.mxu0 0.0
        %281 = vmatprep.subr.mxu0 0.0
        %282 = vmatpush1.msra.mxu0 0.0
        %283 = vmatprep.subr.mxu0 0.0
        %284 = vmatpush1.msra.mxu0 0.0
        %285 = vmatprep.subr.mxu0 0.0
        %286 = vmatpush1.msra.mxu0 0.0
        %287 = vmatprep.subr.mxu0 0.0
        %288 = vmatpush1.msra.mxu0 0.0
        %289 = vmatprep.subr.mxu0 0.0
        %290 = vmatpush1.msra.mxu0 0.0
        %291 = vmatprep.subr.mxu0 0.0
        %292 = vmatpush1.msra.mxu0 0.0
        %293 = vmatprep.subr.mxu0 0.0
        %294 = vmatpush1.msra.mxu0 0.0
        %295 = vmatprep.subr.mxu0 0.0
        %296 = vmatpush1.msra.mxu0 0.0
        %297 = vmatprep.subr.mxu0 0.0
        %298 = vmatpush1.msra.mxu0 0.0
        %299 = vmatprep.subr.mxu0 0.0
        %300 = vmatpush1.msra.mxu0 0.0
        %301 = vmatprep.subr.mxu0 0.0
        %302 = vmatpush1.msra.mxu0 0.0
        %303 = vmatprep.subr.mxu0 0.0
        %304 = vmatpush1.msra.mxu0 0.0
        %305 = vmatprep.subr.mxu0 0.0
        %306 = vmatpush1.msra.mxu0 0.0
        %307 = vmatprep.subr.mxu0 0.0
        %308 = vmatpush1.msra.mxu0 0.0
        %309 = vmatprep.subr.mxu0 0.0
        %310 = vmatpush1.msra.mxu0 0.0
        %311 = vmatprep.subr.mxu0 0.0
        %312 = vmatpush1.msra.mxu0 0.0
        %313 = vmatprep.subr.mxu0 0.0
        %314 = vmatpush1.msra.mxu0 0.0
        %315 = vmatprep.subr.mxu0 0.0
        %316 = vmatpush1.msra.mxu0 0.0
        %317 = vmatprep.subr.mxu0 0.0
        %318 = vmatpush1.msra.mxu0 0.0
        %319 = vmatprep.subr.mxu0 0.0
        %320 = vmatpush1.msra.mxu0 0.0
        %321 = vmatprep.subr.mxu0 0.0
        %322 = vmatpush1.msra.mxu0 0.0
        %323 = vmatprep.subr.mxu0 0.0
        %324 = vmatpush1.msra.mxu0 0.0
        %325 = vmatprep.subr.mxu0 0.0
        %326 = vmatpush1.msra.mxu0 0.0
        %327 = vmatprep.subr.mxu0 0.0
        %328 = vmatpush1.msra.mxu0 0.0
        %329 = vmatprep.subr.mxu0 0.0
        %330 = vmatpush1.msra.mxu0 0.0
        %331 = vmatprep.subr.mxu0 0.0
        %332 = vmatpush1.msra.mxu0 0.0
        %333 = vmatprep.mubr.f32.mxu0 0.0
        %334 = vmatmul.mubr.f32.gmra.mrb[0].mxu0 %v264
        %v335 = vpop.f32.mrb[0].mxu0
        %v336 = vadd.f32 0.0, %v335
        %v337 = vpop.f32.mrb[0].mxu0
        %v338 = vadd.f32 0.0, %v337
        %339 = vmatprep.mubr.f32.mxu0 0.0
        %340 = vmatmul.mubr.f32.gmra.mrb[0].mxu0 %v267
        %v341 = vpop.f32.mrb[0].mxu0
        %v342 = vadd.f32 0.0, %v341
        %v343 = vpop.f32.mrb[0].mxu0
        %v344 = vadd.f32 0.0, %v343
        %345 = vdwg.mxu0
        %346 = vmatprep.subr.mxu0 %v260
        %347 = vmatpush1.msra.mxu0 %v259
        %348 = vmatprep.subr.mxu0 0.0
        %349 = vmatpush1.msra.mxu0 0.0
        %350 = vmatprep.subr.mxu0 0.0
        %351 = vmatpush1.msra.mxu0 0.0
        %352 = vmatprep.subr.mxu0 0.0
        %353 = vmatpush1.msra.mxu0 0.0
        %354 = vmatprep.subr.mxu0 0.0
        %355 = vmatpush1.msra.mxu0 0.0
        %356 = vmatprep.subr.mxu0 0.0
        %357 = vmatpush1.msra.mxu0 0.0
        %358 = vmatprep.subr.mxu0 0.0
        %359 = vmatpush1.msra.mxu0 0.0
        %360 = vmatprep.subr.mxu0 0.0
        %361 = vmatpush1.msra.mxu0 0.0
        %362 = vmatprep.subr.mxu0 0.0
        %363 = vmatpush1.msra.mxu0 0.0
        %364 = vmatprep.subr.mxu0 0.0
        %365 = vmatpush1.msra.mxu0 0.0
        %366 = vmatprep.subr.mxu0 0.0
        %367 = vmatpush1.msra.mxu0 0.0
        %368 = vmatprep.subr.mxu0 0.0
        %369 = vmatpush1.msra.mxu0 0.0
        %370 = vmatprep.subr.mxu0 0.0
        %371 = vmatpush1.msra.mxu0 0.0
        %372 = vmatprep.subr.mxu0 0.0
        %373 = vmatpush1.msra.mxu0 0.0
        %374 = vmatprep.subr.mxu0 0.0
        %375 = vmatpush1.msra.mxu0 0.0
        %376 = vmatprep.subr.mxu0 0.0
        %377 = vmatpush1.msra.mxu0 0.0
        %378 = vmatprep.subr.mxu0 0.0
        %379 = vmatpush1.msra.mxu0 0.0
        %380 = vmatprep.subr.mxu0 0.0
        %381 = vmatpush1.msra.mxu0 0.0
        %382 = vmatprep.subr.mxu0 0.0
        %383 = vmatpush1.msra.mxu0 0.0
        %384 = vmatprep.subr.mxu0 0.0
        %385 = vmatpush1.msra.mxu0 0.0
        %386 = vmatprep.subr.mxu0 0.0
        %387 = vmatpush1.msra.mxu0 0.0
        %388 = vmatprep.subr.mxu0 0.0
        %389 = vmatpush1.msra.mxu0 0.0
        %390 = vmatprep.subr.mxu0 0.0
        %391 = vmatpush1.msra.mxu0 0.0
        %392 = vmatprep.subr.mxu0 0.0
        %393 = vmatpush1.msra.mxu0 0.0
        %394 = vmatprep.subr.mxu0 0.0
        %395 = vmatpush1.msra.mxu0 0.0
        %396 = vmatprep.subr.mxu0 0.0
        %397 = vmatpush1.msra.mxu0 0.0
        %398 = vmatprep.subr.mxu0 0.0
        %399 = vmatpush1.msra.mxu0 0.0
        %400 = vmatprep.subr.mxu0 0.0
        %401 = vmatpush1.msra.mxu0 0.0
        %402 = vmatprep.subr.mxu0 0.0
        %403 = vmatpush1.msra.mxu0 0.0
        %404 = vmatprep.subr.mxu0 0.0
        %405 = vmatpush1.msra.mxu0 0.0
        %406 = vmatprep.subr.mxu0 0.0
        %407 = vmatpush1.msra.mxu0 0.0
        %408 = vmatprep.subr.mxu0 0.0
        %409 = vmatpush1.msra.mxu0 0.0
        %410 = vmatprep.mubr.f32.mxu0 0.0
        %411 = vmatmul.mubr.f32.gmra.mrb[0].mxu0 %v264
        %v412 = vpop.f32.mrb[0].mxu0
        %v413 = vadd.f32 0.0, %v412
        %v414 = vpop.f32.mrb[0].mxu0
        %v415 = vadd.f32 0.0, %v414
        %416 = vmatprep.mubr.f32.mxu0 0.0
        %417 = vmatmul.mubr.f32.gmra.mrb[0].mxu0 %v267
        %v418 = vpop.f32.mrb[0].mxu0
        %v419 = vadd.f32 0.0, %v418
        %v420 = vpop.f32.mrb[0].mxu0
        %v421 = vadd.f32 0.0, %v420
        %422 = vdwg.mxu0
        %v423 = vld [vmem:[%s253] sm:$0x3]
        %v425 = vsel %vm262, %v423, 0
        %427 = vmatprep.subr.mxu0 0.0
        %428 = vmatpush1.msra.mxu0 %v260
        %429 = vmatprep.subr.mxu0 0.0
        %430 = vmatpush1.msra.mxu0 0.0
        %431 = vmatprep.subr.mxu0 0.0
        %432 = vmatpush1.msra.mxu0 0.0
        %433 = vmatprep.subr.mxu0 0.0
        %434 = vmatpush1.msra.mxu0 0.0
        %435 = vmatprep.subr.mxu0 0.0
        %436 = vmatpush1.msra.mxu0 0.0
        %437 = vmatprep.subr.mxu0 0.0
        %438 = vmatpush1.msra.mxu0 0.0
        %439 = vmatprep.subr.mxu0 0.0
        %440 = vmatpush1.msra.mxu0 0.0
        %441 = vmatprep.subr.mxu0 0.0
        %442 = vmatpush1.msra.mxu0 0.0
        %443 = vmatprep.subr.mxu0 0.0
        %444 = vmatpush1.msra.mxu0 0.0
        %445 = vmatprep.subr.mxu0 0.0
        %446 = vmatpush1.msra.mxu0 0.0
        %447 = vmatprep.subr.mxu0 0.0
        %448 = vmatpush1.msra.mxu0 0.0
        %449 = vmatprep.subr.mxu0 0.0
        %450 = vmatpush1.msra.mxu0 0.0
        %451 = vmatprep.subr.mxu0 0.0
        %452 = vmatpush1.msra.mxu0 0.0
        %453 = vmatprep.subr.mxu0 0.0
        %454 = vmatpush1.msra.mxu0 0.0
        %455 = vmatprep.subr.mxu0 0.0
        %456 = vmatpush1.msra.mxu0 0.0
        %457 = vmatprep.subr.mxu0 0.0
        %458 = vmatpush1.msra.mxu0 0.0
        %459 = vmatprep.subr.mxu0 0.0
        %460 = vmatpush1.msra.mxu0 0.0
        %461 = vmatprep.subr.mxu0 0.0
        %462 = vmatpush1.msra.mxu0 0.0
        %463 = vmatprep.subr.mxu0 0.0
        %464 = vmatpush1.msra.mxu0 0.0
        %465 = vmatprep.subr.mxu0 0.0
        %466 = vmatpush1.msra.mxu0 0.0
        %467 = vmatprep.subr.mxu0 0.0
        %468 = vmatpush1.msra.mxu0 0.0
        %469 = vmatprep.subr.mxu0 0.0
        %470 = vmatpush1.msra.mxu0 0.0
        %471 = vmatprep.subr.mxu0 0.0
        %472 = vmatpush1.msra.mxu0 0.0
        %473 = vmatprep.subr.mxu0 0.0
        %474 = vmatpush1.msra.mxu0 0.0
        %475 = vmatprep.subr.mxu0 0.0
        %476 = vmatpush1.msra.mxu0 0.0
        %477 = vmatprep.subr.mxu0 0.0
        %478 = vmatpush1.msra.mxu0 0.0
        %479 = vmatprep.subr.mxu0 0.0
        %480 = vmatpush1.msra.mxu0 0.0
        %481 = vmatprep.subr.mxu0 0.0
        %482 = vmatpush1.msra.mxu0 0.0
        %483 = vmatprep.subr.mxu0 0.0
        %484 = vmatpush1.msra.mxu0 0.0
        %485 = vmatprep.subr.mxu0 0.0
        %486 = vmatpush1.msra.mxu0 0.0
        %487 = vmatprep.subr.mxu0 0.0
        %488 = vmatpush1.msra.mxu0 0.0
        %489 = vmatprep.subr.mxu0 0.0
        %490 = vmatpush1.msra.mxu0 0.0
        %491 = vmatprep.mubr.f32.mxu0 0.0
        %492 = vmatmul.mubr.f32.gmra.mrb[0].mxu0 %v425
        %v493 = vpop.f32.mrb[0].mxu0
        %v494 = vadd.f32 0.0, %v493
        %v495 = vpop.f32.mrb[0].mxu0
        %496 = vdwg.mxu0
        %v497 = vld [vmem:[%s2] sm:$0xff]
        %v498 = vrot.slane %v423, 1
        %v499 = vsel %vm262, %v498, 0
        %501 = vmatprep.subr.mxu0 0.0
        %502 = vmatpush1.msra.mxu0 %v497
        %503 = vmatprep.subr.mxu0 0.0
        %504 = vmatpush1.msra.mxu0 0.0
        %505 = vmatprep.subr.mxu0 0.0
        %506 = vmatpush1.msra.mxu0 0.0
        %507 = vmatprep.subr.mxu0 0.0
        %508 = vmatpush1.msra.mxu0 0.0
        %509 = vmatprep.subr.mxu0 0.0
        %510 = vmatpush1.msra.mxu0 0.0
        %511 = vmatprep.subr.mxu0 0.0
        %512 = vmatpush1.msra.mxu0 0.0
        %513 = vmatprep.subr.mxu0 0.0
        %514 = vmatpush1.msra.mxu0 0.0
        %515 = vmatprep.subr.mxu0 0.0
        %516 = vmatpush1.msra.mxu0 0.0
        %517 = vmatprep.subr.mxu0 0.0
        %518 = vmatpush1.msra.mxu0 0.0
        %519 = vmatprep.subr.mxu0 0.0
        %520 = vmatpush1.msra.mxu0 0.0
        %521 = vmatprep.subr.mxu0 0.0
        %522 = vmatpush1.msra.mxu0 0.0
        %523 = vmatprep.subr.mxu0 0.0
        %524 = vmatpush1.msra.mxu0 0.0
        %525 = vmatprep.subr.mxu0 0.0
        %526 = vmatpush1.msra.mxu0 0.0
        %527 = vmatprep.subr.mxu0 0.0
        %528 = vmatpush1.msra.mxu0 0.0
        %529 = vmatprep.subr.mxu0 0.0
        %530 = vmatpush1.msra.mxu0 0.0
        %531 = vmatprep.subr.mxu0 0.0
        %532 = vmatpush1.msra.mxu0 0.0
        %533 = vmatprep.subr.mxu0 0.0
        %534 = vmatpush1.msra.mxu0 0.0
        %535 = vmatprep.subr.mxu0 0.0
        %536 = vmatpush1.msra.mxu0 0.0
        %537 = vmatprep.subr.mxu0 0.0
        %538 = vmatpush1.msra.mxu0 0.0
        %539 = vmatprep.subr.mxu0 0.0
        %540 = vmatpush1.msra.mxu0 0.0
        %541 = vmatprep.subr.mxu0 0.0
        %542 = vmatpush1.msra.mxu0 0.0
        %543 = vmatprep.subr.mxu0 0.0
        %544 = vmatpush1.msra.mxu0 0.0
        %545 = vmatprep.subr.mxu0 0.0
        %546 = vmatpush1.msra.mxu0 0.0
        %547 = vmatprep.subr.mxu0 0.0
        %548 = vmatpush1.msra.mxu0 0.0
        %549 = vmatprep.subr.mxu0 0.0
        %550 = vmatpush1.msra.mxu0 0.0
        %551 = vmatprep.subr.mxu0 0.0
        %552 = vmatpush1.msra.mxu0 0.0
        %553 = vmatprep.subr.mxu0 0.0
        %554 = vmatpush1.msra.mxu0 0.0
        %555 = vmatprep.subr.mxu0 0.0
        %556 = vmatpush1.msra.mxu0 0.0
        %557 = vmatprep.subr.mxu0 0.0
        %558 = vmatpush1.msra.mxu0 0.0
        %559 = vmatprep.subr.mxu0 0.0
        %560 = vmatpush1.msra.mxu0 0.0
        %561 = vmatprep.subr.mxu0 0.0
        %562 = vmatpush1.msra.mxu0 0.0
        %563 = vmatprep.subr.mxu0 0.0
        %564 = vmatpush1.msra.mxu0 0.0
        %565 = vmatprep.mubr.f32.mxu0 0.0
        %566 = vmatmul.mubr.f32.gmra.mrb[0].mxu0 %v499
        %v567 = vpop.f32.mrb[0].mxu0
        %v568 = vadd.f32 0.0, %v567
        %v569 = vpop.f32.mrb[0].mxu0
        %570 = vdwg.mxu0
        %v571 = vrot.slane %v415, 7
        %v572 = vrot.slane %v421, 7
        %v573 = vlaneseq
        %v574 = vshrl.u32 %v573, 7
        %vm575 = vcmp.lt.s32.totalorder %v574, 1
        %v576 = vsel %vm575, %v571, %v572
        %v577 = vsel %vm575, %v572, %v571
        %v578 = vrot.slane %v336, 1
        %v579 = vrot.slane %v342, 1
        %vm580 = vcmp.lt.s32.totalorder %v574, 7
        %v581 = vsel %vm580, %v578, %v579
        %v582 = vsel %vm580, %v579, %v578
        %v583 = vadd.s32 %v574, 8
        %vm584 = vcmp.eq.s32.totalorder %v574, 0
        %vm585 = vcmp.eq.s32.totalorder %v583, 0
        %v586 = vlaneseq
        %v587 = vshrl.u32 %v586, 7
        %v588 = vsub.s32 0, %v587
        %v589 = vrot.slane %v494, %v588
        %v590 = vsel %vm584, %v589, %v577
        %v591 = vsel %vm585, %v589, %v576
        %vm592 = vcmp.eq.s32.totalorder %v574, 15
        %vm593 = vcmp.eq.s32.totalorder %v583, 15
        %v594 = vlaneseq
        %v595 = vshrl.u32 %v594, 7
        %v596 = vsub.s32 0, %v595
        %v597 = vrot.slane %v568, %v596
        %v598 = vsel %vm592, %v597, %v581
        %v599 = vsel %vm593, %v597, %v582
        %v600 = vadd.f32 %v338, %v590
        %v601 = vadd.f32 %v344, %v591
        %v603 = vlaneseq
        %v604 = vshrl.u32 %v603, 7
        %v605 = vsub.s32 0, %v604
        %v606 = vrot.slane %v261, %v605
        %v608 = vadd.f32 %v600, %v606
        %v609 = vadd.f32 %v601, %v606
        %v610 = vadd.f32 %v413, %v598
        %v611 = vadd.f32 %v419, %v599
        %v612 = vadd.f32 %v610, %v606
        %v613 = vadd.f32 %v611, %v606
        %614 = vst.msk [vmem:[%s236] sm:$0xff] %vm262, %v608
        %615 = vst.msk [vmem:[%s236 + $0x8] sm:$0xff] %vm262, %v609
        %618 = vrot.lane.b32.xlu0 %v612, 8
        %v619 = vpop.permute.xlu0 %618
        %620 = vrot.lane.b32.xlu0 %v613, 8
        %v621 = vpop.permute.xlu0 %620
        %vm624 = vcmask 130112
        %625 = vst.msk [vmem:[%s236] sm:$0xff] %vm624, %v619
        %626 = vst.msk [vmem:[%s236 + $0x8] sm:$0xff] %vm624, %v621
        %s627 = sand.u32 %s138, 1
        %s628 = scalar_lea.sflag [#allocation3], %s627
        %s629 = sand.u32 %s138, 1
        %s630 = smul.addr %s629, 16
        %s631 = scalar_lea.vmem [#allocation2], %s630
        // Predicated region
        $region37: #{tpu_custom_call.1} parent=35 // pred_check
          %p632 = pneg %p148
        $region38: #{tpu_custom_call.1} parent=35 // pred_check_branch
          %634 = sbr.rel (%p632) target = $region40
        $region39: #{tpu_custom_call.1} parent=35 // pred_region
          %s635 = smul.u32 2, %s23
          %s637 = ssub.s32 256, 256
          %638 = vsyncadd %s628, %s637
          %s639 = smul.addr %s22, 2
          %s640 = sadd.s32 %s635, %s639
          %s641 = smul.addr %s640, 128
          %s642 = scalar_lea.hbm %s4, %s641
          %s643 = sshll.u32 %s631, 4
          %s644 = int_to_ptr.vmem [resolvable:$true] %s643
          %649 = dma.vmem_to_hbm [thread:$0]  %s644, 256, %s642, %s628, 128, 128, 8
        $region40: #{tpu_custom_call.1} parent=35 // pred_fallthru
          _
      $region36: #{tpu_custom_call.1} parent=5 // pred_fallthru
        _
      %p650 = scmp.le.s32.totalorder 2, %s13
      // Predicated region
      $region41: #{tpu_custom_call.1} parent=5 // pred_check
        %p651 = pneg %p650
      $region42: #{tpu_custom_call.1} parent=5 // pred_check_branch
        %653 = sbr.rel (%p651) target = $region44
      $region43: #{tpu_custom_call.1} parent=5 // pred_region
        %s654 = ssub.s32 %s13, 2
        // Predicated region
        $region45: #{tpu_custom_call.1} parent=43 // pred_check
          %p655 = pneg %p154
        $region46: #{tpu_custom_call.1} parent=43 // pred_check_branch
          %657 = sbr.rel (%p655) target = $region48
        $region47: #{tpu_custom_call.1} parent=43 // pred_region
          %s658 = sand.u32 %s139, 1
          %s659 = scalar_lea.sflag [#allocation3], %s658
          %s660 = sand.u32 %s139, 1
          %s661 = smul.addr %s660, 16
          %s662 = scalar_lea.vmem [#allocation2], %s661
          %663 = dma.done %s659, 256
        $region48: #{tpu_custom_call.1} parent=43 // pred_fallthru
          _
      $region44: #{tpu_custom_call.1} parent=5 // pred_fallthru
        _
    $region6: #{tpu_custom_call.1} parent=1 // loop_footer
      %s17 = sadd.s32 1, %s13
    $region7: #{tpu_custom_call.1} parent=1 // loop_footer_branch
      %12 = sbr.rel target = $region3
    $region8: #{tpu_custom_call.1} parent=1 // loop_exit
      _
    %664 = vsyncpa [#allocation3], 1
    %s665 = scalar_lea.sflag [#allocation3], 1
    %666 = vsyncpa %s665, 1

</llo_original>
